<compile_context>
chip_gen: v7x
topology: tpu7x:2x2x1
jax: 0.10.0
libtpu: 0.0.40
codegen_flags: <defaults>
</compile_context>

<pallas_src>
import math

import jax
import jax.numpy as jnp
from jax.experimental import pallas as pl
from jax.experimental.pallas import tpu as pltpu


def _copy_kernel(x_ref, o_ref):
    # Pure aligned copy of an already-flat tile.  No in-kernel reshape: that
    # would cross (8,128) vreg tiles and lower to XLU relayouts / VMEM copies.
    o_ref[...] = x_ref[...]


def _largest_divisor_multiple(size: int, unit: int, cap: int) -> int:
    """Largest divisor of `size` that is a multiple of `unit` and <= cap (0 if none)."""
    best = 0
    limit = min(size, cap)
    t = unit
    while t <= limit:
        if size % t == 0:
            best = t
        t += unit
    return best


def _budget_bytes():
    """(per-tile byte budget, vmem_limit_bytes) -- generation aware.

    2 input buffers + 2 output buffers are double-buffered, so total VMEM use
    is ~4x the per-tile budget; the explicit vmem_limit leaves headroom.
    """
    try:
        vmem = int(pltpu.get_tpu_info().vmem_capacity_bytes)
    except Exception:
        # Unknown part: stay inside v5e's 16 MiB scoped-VMEM default (4x3=12 MiB).
        return 3 << 20, None
    if vmem >= (96 << 20):
        # v5e / v6e: 128 MiB physical VMEM -> 6 MiB tiles (24 MiB of buffers).
        return 6 << 20, 28 << 20
    # v7x: only 64 MiB physical VMEM -> cap total around 20-24 MiB.
    return 5 << 20, 24 << 20


def _pallas_copy(x2, grid, block_shape, index_map, dim_sem, vmem_limit, total_bytes):
    cp_kwargs = dict(dimension_semantics=dim_sem)
    if vmem_limit is not None:
        cp_kwargs["vmem_limit_bytes"] = int(vmem_limit)
    return pl.pallas_call(
        _copy_kernel,
        out_shape=jax.ShapeDtypeStruct(x2.shape, x2.dtype),
        grid_spec=pltpu.PrefetchScalarGridSpec(
            num_scalar_prefetch=0,
            grid=grid,
            in_specs=[pl.BlockSpec(block_shape, index_map)],
            out_specs=pl.BlockSpec(block_shape, index_map),
        ),
        compiler_params=pltpu.CompilerParams(**cp_kwargs),
        cost_estimate=pl.CostEstimate(
            flops=0, transcendentals=0, bytes_accessed=2 * total_bytes
        ),
    )(x2)


def flatten_single(x: jax.Array, dim: int = 1) -> jax.Array:
    """Pallas equivalent of FlattenSingle(dim).forward(x) == torch.flatten(x, dim)."""
    nd = x.ndim
    d = dim + nd if dim < 0 else dim
    if not (0 <= d < nd):
        raise ValueError(f"dim={dim} out of range for {nd}-D input")

    lead = x.shape[:d]
    M = math.prod(x.shape[d:])
    N = math.prod(lead) if lead else 1
    out_shape_final = lead + (M,)
    total = N * M

    if total == 0:
        return jnp.reshape(x, out_shape_final)

    itemsize = jnp.dtype(x.dtype).itemsize
    sublane_unit = {4: 8, 2: 16, 1: 32}.get(itemsize, 8)
    unit = sublane_unit * 128  # elements per fully packed vreg tile for this dtype

    per_buffer, vmem_limit = _budget_bytes()
    budget_elems = max(unit, per_buffer // itemsize)
    total_bytes = total * itemsize

    # --- Preferred path: retile over the FLAT contiguous buffer. -------------
    # Each block is a full-width (sublane_unit, L) slab == one contiguous
    # chunk of C = sublane_unit * L elements: one maximal contiguous DMA per
    # grid step, fully sublane/lane dense, tile bytes near the budget.
    if total % unit == 0:
        chunk = _largest_divisor_multiple(total, unit, budget_elems)
        lanes = chunk // sublane_unit              # multiple of 128
        rows = total // lanes                      # multiple of sublane_unit
        x_flat = jnp.reshape(x, (rows, lanes))     # metadata-only
        y_flat = _pallas_copy(
            x_flat,
            grid=(total // chunk,),
            block_shape=(sublane_unit, lanes),
            index_map=lambda i: (i, 0),
            dim_sem=("parallel",),
            vmem_limit=vmem_limit,
            total_bytes=total_bytes,
        )
        return jnp.reshape(y_flat, out_shape_final)

    # --- Secondary path: (N, M) view with lane-dense rows. -------------------
    # Hit only when N is not a multiple of the sublane packing unit.  Prefer
    # full rows (tm == M -> contiguous DMAs); split M only if a full row does
    # not fit the budget.  Every candidate is byte-budget-guarded (no VMEM OOM).
    if M % 128 == 0:
        tiles = None
        if M <= budget_elems:                      # contiguous full rows
            cap = budget_elems // M
            tn = _largest_divisor_multiple(N, sublane_unit, cap) or (N if N <= cap else 0)
            if tn:
                tiles = (tn, M)
        if tiles is None and 128 <= budget_elems:  # split the row
            cap = budget_elems // 128
            tn = _largest_divisor_multiple(N, sublane_unit, cap) or (N if N <= cap else 0)
            if tn:
                tm = _largest_divisor_multiple(M, 128, budget_elems // tn)
                if tm:
                    tiles = (tn, tm)
        if tiles is not None:
            tn, tm = tiles
            x2 = jnp.reshape(x, (N, M))            # metadata-only
            y2 = _pallas_copy(
                x2,
                grid=(N // tn, M // tm),
                block_shape=(tn, tm),
                index_map=lambda i, j: (i, j),
                dim_sem=("parallel", "parallel"),
                vmem_limit=vmem_limit,
                total_bytes=total_bytes,
            )
            return jnp.reshape(y2, out_shape_final)

    # TODO(synk): ragged-lane shapes would need masked stores; the free,
    # metadata-only reshape is already exact (and the fastest standalone form).
    return jnp.reshape(x, out_shape_final)


if __name__ == "__main__":
    key = jax.random.PRNGKey(0)
    x = jax.random.normal(key, (2, 4, 16, 16), dtype=jnp.float32)

    # dim=1 (the module default): NCHW -> (N, C*H*W); flat contiguous path.
    y = flatten_single(x, dim=1)
    jax.block_until_ready(y)
    ref = jnp.reshape(x, (2, -1))
    assert y.shape == (2, 4 * 16 * 16), y.shape
    assert y.dtype == x.dtype
    assert bool(jnp.array_equal(y, ref))

    # Negative dim (dim=-3 == 1) must take the same path and match.
    y_neg = flatten_single(x, dim=-3)
    jax.block_until_ready(y_neg)
    assert bool(jnp.array_equal(y_neg, ref))

    # dim=2: output stays 3-D (N, C, H*W); exercises collapse + reshape-back.
    y2 = flatten_single(x, dim=2)
    jax.block_until_ready(y2)
    assert bool(jnp.array_equal(y2, jnp.reshape(x, (2, 4, 16 * 16))))

    # bf16 exercises the 16-row sublane packing unit on the flat path.
    xb = x.astype(jnp.bfloat16)
    yb = flatten_single(xb, dim=1)
    jax.block_until_ready(yb)
    assert bool(jnp.array_equal(yb, jnp.reshape(xb, (2, -1))))

    # Odd leading extent exercises the budget-guarded (N, M) full-row path.
    x3 = jax.random.normal(jax.random.PRNGKey(0), (3, 2, 8, 16), dtype=jnp.float32)
    y3 = flatten_single(x3, dim=1)
    jax.block_until_ready(y3)
    assert bool(jnp.array_equal(y3, jnp.reshape(x3, (3, -1))))

    # Ragged shape falls back to the exact, free metadata reshape.
    x4 = jax.random.normal(jax.random.PRNGKey(0), (2, 3, 5, 7), dtype=jnp.float32)
    y4 = flatten_single(x4, dim=1)
    jax.block_until_ready(y4)
    assert bool(jnp.array_equal(y4, jnp.reshape(x4, (2, -1))))

    print("KERNEL_OK")
</pallas_src>

<mosaic_0001>
module attributes {stable_mosaic.version = 11 : i64} {
  func.func @_copy_kernel(%arg0: i32, %arg1: memref<8x256xf32, #tpu.memory_space<vmem>>, %arg2: memref<8x256xf32, #tpu.memory_space<vmem>>) attributes {dimension_semantics = [#tpu.dimension_semantics<parallel>], iteration_bounds = array<i64: 1>, scalar_prefetch = 0 : i64, scratch_operands = 0 : i64, tpu.core_type = #tpu.core_type<tc>, window_params = [{transform_indices = @transform_0, window_bounds = array<i64: 8, 256>}, {transform_indices = @transform_1, window_bounds = array<i64: 8, 256>}]} {
    %c0 = arith.constant 0 : index
    %c0_0 = arith.constant 0 : index
    %0 = vector.load %arg1[%c0, %c0_0] : memref<8x256xf32, #tpu.memory_space<vmem>>, vector<8x256xf32>
    %c0_1 = arith.constant 0 : index
    %c0_2 = arith.constant 0 : index
    %1 = vector.load %arg2[%c0_1, %c0_2] : memref<8x256xf32, #tpu.memory_space<vmem>>, vector<8x256xf32>
    tpu.vector_store %arg2[%c0_1, %c0_2], %0 {strides = array<i32>} : memref<8x256xf32, #tpu.memory_space<vmem>>, vector<8x256xf32>,
    return
  }
  func.func @transform_0(%arg0: i32) -> (i32, i32) {
    %c0_i32 = arith.constant 0 : i32
    %c0_i32_0 = arith.constant 0 : i32
    return %arg0, %c0_i32 : i32, i32
  }
  func.func @transform_1(%arg0: i32) -> (i32, i32) {
    %c0_i32 = arith.constant 0 : i32
    %c0_i32_0 = arith.constant 0 : i32
    return %arg0, %c0_i32 : i32, i32
  }
}

</mosaic_0001>

<llo_original>
// kernel: tpu_custom_call.1
$region0: #{tpu_custom_call.1}
  #allocation0 [shape = 'u32[]', space=smem, size = 0x4, offset = 0x4, fixed_abs, tag = 'smem constant byte address 0x4 - core index']
  #allocation1 [shape = 'u32[144,128]{1,0:T(1,128)}', space=vmem, size = 0x12000, scoped, tag = 'internal scratch']
  %s0 = inlined_call_operand.hbm [shape: f32[8,256], index: 0, kind: input, shape index: {}]
  %s1 = inlined_call_operand.hbm [shape: f32[8,256], index: 1, kind: output, shape index: {}]
  %s2 = sld [smem:[#allocation0]]
  $region18: #{tpu_custom_call.1} parent=0
    _
  %s4 = ssub.s32 1, %s2
  %s5 = scalar_select 0, %s4, %s2
  $region1: #{tpu_custom_call.1} parent=0
    #allocation2 [shape = 'u8[8192]{0}', space=vmem, size = 0x2000, scoped, tag = 'input window, operand 0, single buffered']
    #allocation3 [shape = 's32[1]{0}', space=sflag, size = 0x4, scoped, tag = 'scoped memory for tpu_custom_call.1']
    #allocation4 [shape = 's32[1]{0}', space=sflag, size = 0x4, scoped, tag = 'scoped memory for tpu_custom_call.1']
    #allocation5 [shape = 'u8[8192]{0}', space=vmem, size = 0x2000, scoped, tag = 'output window, operand 0, single buffered']
    %6 = vsyncpa [#allocation3], 0
    %7 = vsyncpa [#allocation4], 0
    // Predicated region
    $region2: #{tpu_custom_call.1} parent=1 // pred_check
      _
    $region3: #{tpu_custom_call.1} parent=1 // pred_check_branch
      %9 = sbr.rel (0) target = $region5
    $region4: #{tpu_custom_call.1} parent=1 // pred_region
      %s11 = ssub.s32 256, 256
      %12 = vsyncadd [#allocation3], %s11
      %s14 = sshll.u32 [#allocation2], 4
      %s15 = int_to_ptr.vmem [resolvable:$true] %s14
      %17 = dma.hbm_to_vmem [thread:$0]  %s0, 256, %s15, [#allocation3]
    $region5: #{tpu_custom_call.1} parent=1 // pred_fallthru
      _
    // Predicated region
    $region6: #{tpu_custom_call.1} parent=1 // pred_check
      _
    $region7: #{tpu_custom_call.1} parent=1 // pred_check_branch
      %19 = sbr.rel (0) target = $region9
    $region8: #{tpu_custom_call.1} parent=1 // pred_region
      %20 = dma.done [#allocation3], 256
    $region9: #{tpu_custom_call.1} parent=1 // pred_fallthru
      _
    %v21 = vld [vmem:[#allocation2] sm:$0xff]
    %v22 = vld [vmem:[#allocation2 + $0x8] sm:$0xff]
    %23 = vst [vmem:[#allocation5] sm:$0xff] %v21
    %24 = vst [vmem:[#allocation5 + $0x8] sm:$0xff] %v22
    // Predicated region
    $region10: #{tpu_custom_call.1} parent=1 // pred_check
      _
    $region11: #{tpu_custom_call.1} parent=1 // pred_check_branch
      %26 = sbr.rel (0) target = $region13
    $region12: #{tpu_custom_call.1} parent=1 // pred_region
      %s28 = ssub.s32 256, 256
      %29 = vsyncadd [#allocation4], %s28
      %s31 = sshll.u32 [#allocation5], 4
      %s32 = int_to_ptr.vmem [resolvable:$true] %s31
      %34 = dma.vmem_to_hbm [thread:$0]  %s32, 256, %s1, [#allocation4]
    $region13: #{tpu_custom_call.1} parent=1 // pred_fallthru
      _
    // Predicated region
    $region14: #{tpu_custom_call.1} parent=1 // pred_check
      _
    $region15: #{tpu_custom_call.1} parent=1 // pred_check_branch
      %36 = sbr.rel (0) target = $region17
    $region16: #{tpu_custom_call.1} parent=1 // pred_region
      %37 = dma.done [#allocation4], 256
    $region17: #{tpu_custom_call.1} parent=1 // pred_fallthru
      _
    %38 = vsyncpa [#allocation3], 1
    %39 = vsyncpa [#allocation4], 1

</llo_original>
